<compile_context>
chip_gen: v7x
topology: tpu7x:2x2x1
jax: 0.10.0
libtpu: 0.0.40
codegen_flags: <defaults>
</compile_context>

<pallas_src>
import functools

import jax
import jax.numpy as jnp
from jax.experimental import pallas as pl
from jax.experimental.pallas import tpu as pltpu


def _round_up(x, m):
    return ((x + m - 1) // m) * m


# -----------------------------------------------------------------------------
# Kernel 1: conv-as-matmul (bf16 in, f32 acc) with BN partial statistics fused
# into the epilogue. stats block rows: 0 = per-tile sum, 1 = per-tile sum-of-
# squares, 2..7 = zeros (so a plain sum over all rows reduces correctly).
# -----------------------------------------------------------------------------
def _conv_stats_kernel(p_ref, w_ref, o_ref, stats_ref):
    acc = jnp.dot(p_ref[...], w_ref[...], preferred_element_type=jnp.float32)
    o_ref[...] = acc                                            # [tm, C_pad] f32
    tile_sum = jnp.sum(acc, axis=0, keepdims=True)              # [1, C_pad]
    tile_sq = jnp.sum(acc * acc, axis=0, keepdims=True)         # [1, C_pad]
    row = jax.lax.broadcasted_iota(jnp.int32, stats_ref.shape, 0)
    stats_ref[...] = jnp.where(row == 0, tile_sum,
                               jnp.where(row == 1, tile_sq, 0.0))


# -----------------------------------------------------------------------------
# Kernel 2: normalize + affine + ReLU, tiled over M.
#   scale = gamma * rsqrt(var + eps),  shift = beta - mean * scale
# -----------------------------------------------------------------------------
def _bn_affine_relu_kernel(y_ref, scale_ref, shift_ref, o_ref, *, relu):
    out = y_ref[...] * scale_ref[...] + shift_ref[...]
    if relu:
        out = jnp.maximum(out, 0.0)
    o_ref[...] = out


def conv_bn_relu(x_nchw, w_hwio, gamma, beta, *, stride, padding,
                 eps=1e-5, relu=True, tm=512):
    """x_nchw: [N, C_in, H, W] f32; w_hwio: [kH, kW, C_in, C_out] f32.
    gamma/beta: [C_out] f32. Returns [N, C_out, H_out, W_out] f32."""
    N, C_in, H, W = x_nchw.shape
    kH, kW, _, C_out = w_hwio.shape

    # ---- glue: NCHW -> NHWC, pad, im2col (emitted in bf16) -------------------
    # TODO(synk): extract patches inside the conv kernel (manual DMA of the
    # needed x_pad rows) to remove the kH*kW im2col HBM blow-up entirely.
    x = jnp.transpose(x_nchw, (0, 2, 3, 1)).astype(jnp.float32)
    x_pad = jnp.pad(x, ((0, 0), (padding, padding), (padding, padding), (0, 0)))
    Ho = (H + 2 * padding - kH) // stride + 1
    Wo = (W + 2 * padding - kW) // stride + 1

    slices = []
    for kh in range(kH):
        for kw in range(kW):
            slices.append(
                x_pad[:, kh:kh + Ho * stride:stride, kw:kw + Wo * stride:stride, :])
    # patch feature ordering = (kh, kw, c) to match w_hwio.reshape(kH*kW*C_in, C_out)
    patches = jnp.stack(slices, axis=3).reshape(N, Ho, Wo, kH * kW * C_in)

    M = N * Ho * Wo
    Kdim = kH * kW * C_in
    C_pad = _round_up(C_out, 128)            # lane-dense outputs (>=128 lanes)

    tm_eff = min(tm, _round_up(M, 8))        # big M tile, multiple of 8 sublanes
    M_pad = _round_up(M, tm_eff)
    num_tiles = M_pad // tm_eff

    patches2d = patches.reshape(M, Kdim)
    if M_pad != M:
        patches2d = jnp.pad(patches2d, ((0, M_pad - M), (0, 0)))
    patches2d = patches2d.astype(jnp.bfloat16)     # bf16 MXU lhs (halves HBM bytes)

    w2d = w_hwio.reshape(Kdim, C_out).astype(jnp.float32)
    if C_pad != C_out:
        w2d = jnp.pad(w2d, ((0, 0), (0, C_pad - C_out)))
    w2d = w2d.astype(jnp.bfloat16)                 # bf16 MXU rhs

    cparams = pltpu.CompilerParams(
        dimension_semantics=("parallel",),         # megacore-shardable M axis
        vmem_limit_bytes=32 * 1024 * 1024,         # headroom vs v7x's 64 MiB VMEM
    )

    # ---- Pallas call 1: tiled conv matmul + fused BN partial stats ----------
    # TODO(synk): for large C_in add a K grid axis ("arbitrary") with an f32
    # accumulator scratch so the (Kdim, C_pad) weight block never outgrows VMEM.
    conv_out, partial_stats = pl.pallas_call(
        _conv_stats_kernel,
        out_shape=(
            jax.ShapeDtypeStruct((M_pad, C_pad), jnp.float32),
            jax.ShapeDtypeStruct((num_tiles * 8, C_pad), jnp.float32),
        ),
        grid_spec=pltpu.PrefetchScalarGridSpec(
            num_scalar_prefetch=0,
            grid=(num_tiles,),
            in_specs=[
                pl.BlockSpec((tm_eff, Kdim), lambda i: (i, 0)),
                pl.BlockSpec((Kdim, C_pad), lambda i: (0, 0)),
            ],
            out_specs=[
                pl.BlockSpec((tm_eff, C_pad), lambda i: (i, 0)),
                pl.BlockSpec((8, C_pad), lambda i: (i, 0)),
            ],
        ),
        compiler_params=cparams,
    )(patches2d, w2d)

    # ---- tiny host-side reduction of the per-tile stats ---------------------
    # Zero-padded M rows contribute 0 to both sums; divide by the TRUE M to get
    # PyTorch training-mode (biased) batch statistics.
    stats = partial_stats.reshape(num_tiles, 8, C_pad).sum(axis=0)   # [8, C_pad]
    total_sum, total_sq = stats[0], stats[1]
    mean = total_sum / M
    var = jnp.maximum(total_sq / M - mean * mean, 0.0)

    gamma_p = jnp.pad(gamma.astype(jnp.float32), (0, C_pad - C_out),
                      constant_values=1.0)
    beta_p = jnp.pad(beta.astype(jnp.float32), (0, C_pad - C_out))
    scale = gamma_p * jax.lax.rsqrt(var + eps)
    shift = beta_p - mean * scale

    # ---- Pallas call 2: tiled normalize + affine + ReLU ---------------------
    bn_out = pl.pallas_call(
        functools.partial(_bn_affine_relu_kernel, relu=relu),
        out_shape=jax.ShapeDtypeStruct((M_pad, C_pad), jnp.float32),
        grid_spec=pltpu.PrefetchScalarGridSpec(
            num_scalar_prefetch=0,
            grid=(num_tiles,),
            in_specs=[
                pl.BlockSpec((tm_eff, C_pad), lambda i: (i, 0)),
                pl.BlockSpec((1, C_pad), lambda i: (0, 0)),
                pl.BlockSpec((1, C_pad), lambda i: (0, 0)),
            ],
            out_specs=pl.BlockSpec((tm_eff, C_pad), lambda i: (i, 0)),
        ),
        compiler_params=cparams,
    )(conv_out, scale.reshape(1, C_pad), shift.reshape(1, C_pad))

    # ---- glue: drop padding, back to NCHW ------------------------------------
    out_nhwc = bn_out[:M, :C_out].reshape(N, Ho, Wo, C_out)
    return jnp.transpose(out_nhwc, (0, 3, 1, 2))


def _reference(x_nchw, w_hwio, gamma, beta, *, stride, padding, eps=1e-5, relu=True):
    """Pure-JAX f32 reference of Conv2d(bias=False)+BatchNorm2d(train)+ReLU."""
    x = jnp.transpose(x_nchw, (0, 2, 3, 1))
    y = jax.lax.conv_general_dilated(
        x, w_hwio,
        window_strides=(stride, stride),
        padding=[(padding, padding), (padding, padding)],
        dimension_numbers=("NHWC", "HWIO", "NHWC"),
    )
    mean = jnp.mean(y, axis=(0, 1, 2), keepdims=True)
    var = jnp.mean((y - mean) ** 2, axis=(0, 1, 2), keepdims=True)
    out = (y - mean) * jax.lax.rsqrt(var + eps) * gamma + beta
    if relu:
        out = jnp.maximum(out, 0.0)
    return jnp.transpose(out, (0, 3, 1, 2))


if __name__ == "__main__":
    # ConvBNReLU(C_in=4, C_out=8, kernel_size=3, stride=1, padding=1,
    #            affine=True, relu=True)
    N, C_in, H, W = 2, 4, 16, 16
    C_out, ksize, stride, padding = 8, 3, 1, 1

    key = jax.random.PRNGKey(0)
    kx, kw = jax.random.split(key)
    x = jax.random.normal(kx, (N, C_in, H, W), dtype=jnp.float32)
    # deterministic synthetic conv weight, HWIO layout
    w = jax.random.normal(kw, (ksize, ksize, C_in, C_out), dtype=jnp.float32) * 0.1
    # PyTorch BatchNorm2d(affine=True) default init: gamma=1, beta=0
    gamma = jnp.ones((C_out,), dtype=jnp.float32)
    beta = jnp.zeros((C_out,), dtype=jnp.float32)

    out = conv_bn_relu(x, w, gamma, beta, stride=stride, padding=padding, relu=True)
    out = jax.block_until_ready(out)

    ref = _reference(x, w, gamma, beta, stride=stride, padding=padding, relu=True)
    assert out.shape == (N, C_out, H, W), out.shape

    # bf16 MXU inputs (f32 accumulation) -> loosen tolerance vs the pure-f32 ref.
    max_err = float(jnp.max(jnp.abs(out - ref)))
    ref_scale = 1.0 + float(jnp.max(jnp.abs(ref)))
    assert max_err < 5e-2 * ref_scale, (max_err, ref_scale)

    print("KERNEL_OK")
</pallas_src>

<mosaic_0001>
module attributes {stable_mosaic.version = 11 : i64} {
  func.func @_conv_stats_kernel(%arg0: i32, %arg1: memref<512x36xbf16, #tpu.memory_space<vmem>>, %arg2: memref<36x128xbf16, #tpu.memory_space<vmem>>, %arg3: memref<512x128xf32, #tpu.memory_space<vmem>>, %arg4: memref<8x128xf32, #tpu.memory_space<vmem>>) attributes {dimension_semantics = [#tpu.dimension_semantics<parallel>], iteration_bounds = array<i64: 1>, scalar_prefetch = 0 : i64, scratch_operands = 0 : i64, tpu.core_type = #tpu.core_type<tc>, window_params = [{transform_indices = @transform_0, window_bounds = array<i64: 512, 36>}, {pipeline_mode = #tpu.pipeline_mode<synchronous>, transform_indices = @transform_1, window_bounds = array<i64: 36, 128>}, {transform_indices = @transform_2, window_bounds = array<i64: 512, 128>}, {transform_indices = @transform_3, window_bounds = array<i64: 8, 128>}]} {
    %c0 = arith.constant 0 : index
    %c0_0 = arith.constant 0 : index
    %0 = vector.load %arg1[%c0, %c0_0] : memref<512x36xbf16, #tpu.memory_space<vmem>>, vector<512x36xbf16>
    %c0_1 = arith.constant 0 : index
    %c0_2 = arith.constant 0 : index
    %1 = vector.load %arg2[%c0_1, %c0_2] : memref<36x128xbf16, #tpu.memory_space<vmem>>, vector<36x128xbf16>
    %cst = arith.constant dense<0.000000e+00> : vector<512x128xf32>
    %2 = tpu.matmul %0, %1, %cst {dimension_numbers = #tpu.dot_dimension_numbers<[1], [0], [0], [1], [0, 0, 1, 1], [], []>} : vector<512x36xbf16>, vector<36x128xbf16>, vector<512x128xf32> -> vector<512x128xf32>
    %c0_3 = arith.constant 0 : index
    %c0_4 = arith.constant 0 : index
    %3 = vector.load %arg3[%c0_3, %c0_4] : memref<512x128xf32, #tpu.memory_space<vmem>>, vector<512x128xf32>
    tpu.vector_store %arg3[%c0_3, %c0_4], %2 {strides = array<i32>} : memref<512x128xf32, #tpu.memory_space<vmem>>, vector<512x128xf32>,
    %cst_5 = arith.constant dense<0.000000e+00> : vector<128xf32>
    %4 = vector.multi_reduction <add>, %2, %cst_5 [0] : vector<512x128xf32> to vector<128xf32>
    %5 = vector.shape_cast %4 : vector<128xf32> to vector<1x128xf32>
    %6 = arith.mulf %2, %2 : vector<512x128xf32>
    %cst_6 = arith.constant dense<0.000000e+00> : vector<128xf32>
    %7 = vector.multi_reduction <add>, %6, %cst_6 [0] : vector<512x128xf32> to vector<128xf32>
    %8 = vector.shape_cast %7 : vector<128xf32> to vector<1x128xf32>
    %9 = tpu.iota {dimensions = array<i32: 0>} : vector<8x128xi32>
    %c0_i32 = arith.constant 0 : i32
    %10 = vector.broadcast %c0_i32 : i32 to vector<8x128xi32>
    %11 = arith.cmpi eq, %9, %10 : vector<8x128xi32>
    %c1_i32 = arith.constant 1 : i32
    %12 = vector.broadcast %c1_i32 : i32 to vector<8x128xi32>
    %13 = arith.cmpi eq, %9, %12 : vector<8x128xi32>
    %cst_7 = arith.constant 0.000000e+00 : f32
    %14 = vector.shape_cast %8 : vector<1x128xf32> to vector<1x128xf32>
    %15 = vector.broadcast %14 : vector<1x128xf32> to vector<8x128xf32>
    %16 = vector.broadcast %cst_7 : f32 to vector<8x128xf32>
    %17 = arith.select %13, %15, %16 : vector<8x128xi1>, vector<8x128xf32>
    %18 = vector.shape_cast %5 : vector<1x128xf32> to vector<1x128xf32>
    %19 = vector.broadcast %18 : vector<1x128xf32> to vector<8x128xf32>
    %20 = arith.select %11, %19, %17 : vector<8x128xi1>, vector<8x128xf32>
    %c0_8 = arith.constant 0 : index
    %c0_9 = arith.constant 0 : index
    %21 = vector.load %arg4[%c0_8, %c0_9] : memref<8x128xf32, #tpu.memory_space<vmem>>, vector<8x128xf32>
    tpu.vector_store %arg4[%c0_8, %c0_9], %20 {strides = array<i32>} : memref<8x128xf32, #tpu.memory_space<vmem>>, vector<8x128xf32>,
    return
  }
  func.func @transform_0(%arg0: i32) -> (i32, i32) {
    %c0_i32 = arith.constant 0 : i32
    %c0_i32_0 = arith.constant 0 : i32
    return %arg0, %c0_i32 : i32, i32
  }
  func.func @transform_1(%arg0: i32) -> (i32, i32) {
    %c0_i32 = arith.constant 0 : i32
    %c0_i32_0 = arith.constant 0 : i32
    %c0_i32_1 = arith.constant 0 : i32
    return %c0_i32, %c0_i32_0 : i32, i32
  }
  func.func @transform_2(%arg0: i32) -> (i32, i32) {
    %c0_i32 = arith.constant 0 : i32
    %c0_i32_0 = arith.constant 0 : i32
    return %arg0, %c0_i32 : i32, i32
  }
  func.func @transform_3(%arg0: i32) -> (i32, i32) {
    %c0_i32 = arith.constant 0 : i32
    %c0_i32_0 = arith.constant 0 : i32
    return %arg0, %c0_i32 : i32, i32
  }
}

</mosaic_0001>

<llo_original>
// kernel: tpu_custom_call.1
$region0: #{tpu_custom_call.1}
  #allocation0 [shape = 'u32[]', space=smem, size = 0x4, offset = 0x4, fixed_abs, tag = 'smem constant byte address 0x4 - core index']
  #allocation1 [shape = 'u32[144,128]{1,0:T(1,128)}', space=vmem, size = 0x12000, scoped, tag = 'internal scratch']
  %s0 = inlined_call_operand.vmem [shape: bf16[512,36], index: 0, kind: input, shape index: {}]
  %s1 = inlined_call_operand.vmem [shape: bf16[36,128], index: 1, kind: input, shape index: {}]
  %s2 = inlined_call_operand.hbm [shape: f32[512,128], index: 2, kind: output, shape index: {0}]
  %s3 = inlined_call_operand.hbm [shape: f32[8,128], index: 3, kind: output, shape index: {1}]
  %4 = xla_tuple %s2, %s3
  %s5 = sld [smem:[#allocation0]]
  $region26: #{tpu_custom_call.1} parent=0
    _
  %s7 = ssub.s32 1, %s5
  %s8 = scalar_select 0, %s7, %s5
  $region1: #{tpu_custom_call.1} parent=0
    #allocation2 [shape = 'u8[262144]{0}', space=vmem, size = 0x40000, scoped, tag = 'output window, operand 0, single buffered']
    #allocation3 [shape = 's32[1]{0}', space=sflag, size = 0x4, scoped, tag = 'scoped memory for tpu_custom_call.1']
    #allocation4 [shape = 'u8[4096]{0}', space=vmem, size = 0x1000, scoped, tag = 'output window, operand 1, single buffered']
    #allocation5 [shape = 's32[1]{0}', space=sflag, size = 0x4, scoped, tag = 'scoped memory for tpu_custom_call.1']
    %9 = vsyncpa [#allocation3], 0
    %10 = vsyncpa [#allocation5], 0
    // Predicated region
    $region2: #{tpu_custom_call.1} parent=1 // pred_check
      _
    $region3: #{tpu_custom_call.1} parent=1 // pred_check_branch
      %12 = sbr.rel (0) target = $region5
    $region4: #{tpu_custom_call.1} parent=1 // pred_region
      _
    $region5: #{tpu_custom_call.1} parent=1 // pred_fallthru
      _
    // Predicated region
    $region6: #{tpu_custom_call.1} parent=1 // pred_check
      _
    $region7: #{tpu_custom_call.1} parent=1 // pred_check_branch
      %14 = sbr.rel (0) target = $region9
    $region8: #{tpu_custom_call.1} parent=1 // pred_region
      _
    $region9: #{tpu_custom_call.1} parent=1 // pred_fallthru
      _
    %v16 = vld [vmem:[%s0] sm:$0xf]
    %v17 = vld [vmem:[%s0 + $0x4] sm:$0xf]
    %v18 = vld [vmem:[%s0 + $0x8] sm:$0xf]
    %v19 = vld [vmem:[%s0 + $0xc] sm:$0xf]
    %v20 = vld [vmem:[%s0 + $0x10] sm:$0xf]
    %v21 = vld [vmem:[%s0 + $0x14] sm:$0xf]
    %v22 = vld [vmem:[%s0 + $0x18] sm:$0xf]
    %v23 = vld [vmem:[%s0 + $0x1c] sm:$0xf]
    %v24 = vld [vmem:[%s0 + $0x20] sm:$0xf]
    %v25 = vld [vmem:[%s0 + $0x24] sm:$0xf]
    %v26 = vld [vmem:[%s0 + $0x28] sm:$0xf]
    %v27 = vld [vmem:[%s0 + $0x2c] sm:$0xf]
    %v28 = vld [vmem:[%s0 + $0x30] sm:$0xf]
    %v29 = vld [vmem:[%s0 + $0x34] sm:$0xf]
    %v30 = vld [vmem:[%s0 + $0x38] sm:$0xf]
    %v31 = vld [vmem:[%s0 + $0x3c] sm:$0xf]
    %v32 = vld [vmem:[%s0 + $0x40] sm:$0xf]
    %v33 = vld [vmem:[%s0 + $0x44] sm:$0xf]
    %v34 = vld [vmem:[%s0 + $0x48] sm:$0xf]
    %v35 = vld [vmem:[%s0 + $0x4c] sm:$0xf]
    %v36 = vld [vmem:[%s0 + $0x50] sm:$0xf]
    %v37 = vld [vmem:[%s0 + $0x54] sm:$0xf]
    %v38 = vld [vmem:[%s0 + $0x58] sm:$0xf]
    %v39 = vld [vmem:[%s0 + $0x5c] sm:$0xf]
    %v40 = vld [vmem:[%s0 + $0x60] sm:$0xf]
    %v41 = vld [vmem:[%s0 + $0x64] sm:$0xf]
    %v42 = vld [vmem:[%s0 + $0x68] sm:$0xf]
    %v43 = vld [vmem:[%s0 + $0x6c] sm:$0xf]
    %v44 = vld [vmem:[%s0 + $0x70] sm:$0xf]
    %v45 = vld [vmem:[%s0 + $0x74] sm:$0xf]
    %v46 = vld [vmem:[%s0 + $0x78] sm:$0xf]
    %v47 = vld [vmem:[%s0 + $0x7c] sm:$0xf]
    %v48 = vld [vmem:[%s0 + $0x80] sm:$0xf]
    %v49 = vld [vmem:[%s0 + $0x84] sm:$0xf]
    %v50 = vld [vmem:[%s0 + $0x88] sm:$0xf]
    %v51 = vld [vmem:[%s0 + $0x8c] sm:$0xf]
    %v52 = vld [vmem:[%s0 + $0x90] sm:$0xf]
    %v53 = vld [vmem:[%s0 + $0x94] sm:$0xf]
    %v54 = vld [vmem:[%s0 + $0x98] sm:$0xf]
    %v55 = vld [vmem:[%s0 + $0x9c] sm:$0xf]
    %v56 = vld [vmem:[%s0 + $0xa0] sm:$0xf]
    %v57 = vld [vmem:[%s0 + $0xa4] sm:$0xf]
    %v58 = vld [vmem:[%s0 + $0xa8] sm:$0xf]
    %v59 = vld [vmem:[%s0 + $0xac] sm:$0xf]
    %v60 = vld [vmem:[%s0 + $0xb0] sm:$0xf]
    %v61 = vld [vmem:[%s0 + $0xb4] sm:$0xf]
    %v62 = vld [vmem:[%s0 + $0xb8] sm:$0xf]
    %v63 = vld [vmem:[%s0 + $0xbc] sm:$0xf]
    %v64 = vld [vmem:[%s0 + $0xc0] sm:$0xf]
    %v65 = vld [vmem:[%s0 + $0xc4] sm:$0xf]
    %v66 = vld [vmem:[%s0 + $0xc8] sm:$0xf]
    %v67 = vld [vmem:[%s0 + $0xcc] sm:$0xf]
    %v68 = vld [vmem:[%s0 + $0xd0] sm:$0xf]
    %v69 = vld [vmem:[%s0 + $0xd4] sm:$0xf]
    %v70 = vld [vmem:[%s0 + $0xd8] sm:$0xf]
    %v71 = vld [vmem:[%s0 + $0xdc] sm:$0xf]
    %v72 = vld [vmem:[%s0 + $0xe0] sm:$0xf]
    %v73 = vld [vmem:[%s0 + $0xe4] sm:$0xf]
    %v74 = vld [vmem:[%s0 + $0xe8] sm:$0xf]
    %v75 = vld [vmem:[%s0 + $0xec] sm:$0xf]
    %v76 = vld [vmem:[%s0 + $0xf0] sm:$0xf]
    %v77 = vld [vmem:[%s0 + $0xf4] sm:$0xf]
    %v78 = vld [vmem:[%s0 + $0xf8] sm:$0xf]
    %v79 = vld [vmem:[%s0 + $0xfc] sm:$0xf]
    %v80 = vld [vmem:[%s1] sm:$0xf]
    %v81 = vld [vmem:[%s1 + $0x4] sm:$0xf]
    %v82 = vld [vmem:[%s1 + $0x8] sm:$0xf]
    %v83 = vld [vmem:[%s1 + $0xc] sm:$0xf]
    %v84 = vld [vmem:[%s1 + $0x10] sm:$0x3]
    %v149 = vunpack.c.l.b16 %v16
    %v150 = vunpack.c.l.b16 %v17
    %v151 = vunpack.c.l.b16 %v18
    %v152 = vunpack.c.l.b16 %v19
    %v153 = vunpack.c.l.b16 %v20
    %v154 = vunpack.c.l.b16 %v21
    %v155 = vunpack.c.l.b16 %v22
    %v156 = vunpack.c.l.b16 %v23
    %v157 = vunpack.c.l.b16 %v24
    %v158 = vunpack.c.l.b16 %v25
    %v159 = vunpack.c.l.b16 %v26
    %v160 = vunpack.c.l.b16 %v27
    %v161 = vunpack.c.l.b16 %v28
    %v162 = vunpack.c.l.b16 %v29
    %v163 = vunpack.c.l.b16 %v30
    %v164 = vunpack.c.l.b16 %v31
    %v165 = vunpack.c.l.b16 %v32
    %v166 = vunpack.c.l.b16 %v33
    %v167 = vunpack.c.l.b16 %v34
    %v168 = vunpack.c.l.b16 %v35
    %v169 = vunpack.c.l.b16 %v36
    %v170 = vunpack.c.l.b16 %v37
    %v171 = vunpack.c.l.b16 %v38
    %v172 = vunpack.c.l.b16 %v39
    %v173 = vunpack.c.l.b16 %v40
    %v174 = vunpack.c.l.b16 %v41
    %v175 = vunpack.c.l.b16 %v42
    %v176 = vunpack.c.l.b16 %v43
    %v177 = vunpack.c.l.b16 %v44
    %v178 = vunpack.c.l.b16 %v45
    %v179 = vunpack.c.l.b16 %v46
    %v180 = vunpack.c.l.b16 %v47
    %v181 = vunpack.c.l.b16 %v48
    %v182 = vunpack.c.l.b16 %v49
    %v183 = vunpack.c.l.b16 %v50
    %v184 = vunpack.c.l.b16 %v51
    %v185 = vunpack.c.l.b16 %v52
    %v186 = vunpack.c.l.b16 %v53
    %v187 = vunpack.c.l.b16 %v54
    %v188 = vunpack.c.l.b16 %v55
    %v189 = vunpack.c.l.b16 %v56
    %v190 = vunpack.c.l.b16 %v57
    %v191 = vunpack.c.l.b16 %v58
    %v192 = vunpack.c.l.b16 %v59
    %v193 = vunpack.c.l.b16 %v60
    %v194 = vunpack.c.l.b16 %v61
    %v195 = vunpack.c.l.b16 %v62
    %v196 = vunpack.c.l.b16 %v63
    %v197 = vunpack.c.l.b16 %v64
    %v198 = vunpack.c.l.b16 %v65
    %v199 = vunpack.c.l.b16 %v66
    %v200 = vunpack.c.l.b16 %v67
    %v201 = vunpack.c.l.b16 %v68
    %v202 = vunpack.c.l.b16 %v69
    %v203 = vunpack.c.l.b16 %v70
    %v204 = vunpack.c.l.b16 %v71
    %v205 = vunpack.c.l.b16 %v72
    %v206 = vunpack.c.l.b16 %v73
    %v207 = vunpack.c.l.b16 %v74
    %v208 = vunpack.c.l.b16 %v75
    %v209 = vunpack.c.l.b16 %v76
    %v210 = vunpack.c.l.b16 %v77
    %v211 = vunpack.c.l.b16 %v78
    %v212 = vunpack.c.l.b16 %v79
    %v213 = vpack.c.b16 %v150, %v149
    %v214 = vpack.c.b16 %v152, %v151
    %v215 = vpack.c.b16 %v154, %v153
    %v216 = vpack.c.b16 %v156, %v155
    %v217 = vpack.c.b16 %v158, %v157
    %v218 = vpack.c.b16 %v160, %v159
    %v219 = vpack.c.b16 %v162, %v161
    %v220 = vpack.c.b16 %v164, %v163
    %v221 = vpack.c.b16 %v166, %v165
    %v222 = vpack.c.b16 %v168, %v167
    %v223 = vpack.c.b16 %v170, %v169
    %v224 = vpack.c.b16 %v172, %v171
    %v225 = vpack.c.b16 %v174, %v173
    %v226 = vpack.c.b16 %v176, %v175
    %v227 = vpack.c.b16 %v178, %v177
    %v228 = vpack.c.b16 %v180, %v179
    %v229 = vpack.c.b16 %v182, %v181
    %v230 = vpack.c.b16 %v184, %v183
    %v231 = vpack.c.b16 %v186, %v185
    %v232 = vpack.c.b16 %v188, %v187
    %v233 = vpack.c.b16 %v190, %v189
    %v234 = vpack.c.b16 %v192, %v191
    %v235 = vpack.c.b16 %v194, %v193
    %v236 = vpack.c.b16 %v196, %v195
    %v237 = vpack.c.b16 %v198, %v197
    %v238 = vpack.c.b16 %v200, %v199
    %v239 = vpack.c.b16 %v202, %v201
    %v240 = vpack.c.b16 %v204, %v203
    %v241 = vpack.c.b16 %v206, %v205
    %v242 = vpack.c.b16 %v208, %v207
    %v243 = vpack.c.b16 %v210, %v209
    %v244 = vpack.c.b16 %v212, %v211
    %v250 = vunpack.c.l.b16 %v80
    %v251 = vunpack.c.l.b16 %v81
    %v252 = vunpack.c.l.b16 %v82
    %v253 = vunpack.c.l.b16 %v83
    %v254 = vunpack.c.l.b16 %v84
    %v255 = vpack.c.b16 %v251, %v250
    %v256 = vpack.c.b16 %v253, %v252
    %v257 = vpack.c.b16 %v254, %v254
    %vm260 = vcmask 293888
    %v262 = vsel %vm260, %v213, 0
    %v265 = vsel %vm260, %v214, 0
    %v268 = vsel %vm260, %v215, 0
    %v271 = vsel %vm260, %v216, 0
    %v274 = vsel %vm260, %v217, 0
    %v277 = vsel %vm260, %v218, 0
    %v280 = vsel %vm260, %v219, 0
    %v283 = vsel %vm260, %v220, 0
    %v286 = vsel %vm260, %v221, 0
    %v289 = vsel %vm260, %v222, 0
    %v292 = vsel %vm260, %v223, 0
    %v295 = vsel %vm260, %v224, 0
    %v298 = vsel %vm260, %v225, 0
    %v301 = vsel %vm260, %v226, 0
    %v304 = vsel %vm260, %v227, 0
    %v307 = vsel %vm260, %v228, 0
    %v310 = vsel %vm260, %v229, 0
    %v313 = vsel %vm260, %v230, 0
    %v316 = vsel %vm260, %v231, 0
    %v319 = vsel %vm260, %v232, 0
    %v322 = vsel %vm260, %v233, 0
    %v325 = vsel %vm260, %v234, 0
    %v328 = vsel %vm260, %v235, 0
    %v331 = vsel %vm260, %v236, 0
    %v334 = vsel %vm260, %v237, 0
    %v337 = vsel %vm260, %v238, 0
    %v340 = vsel %vm260, %v239, 0
    %v343 = vsel %vm260, %v240, 0
    %v346 = vsel %vm260, %v241, 0
    %v349 = vsel %vm260, %v242, 0
    %v352 = vsel %vm260, %v243, 0
    %v355 = vsel %vm260, %v244, 0
    %vm357 = vcmask 1041408
    %v359 = vsel %vm357, %v257, 0
    %361 = vmatprep.subr.bf16.mxu0 0
    %362 = vmatpush1.bf16.msra.mxu0 %v255
    %363 = vmatprep.subr.bf16.mxu0 0
    %364 = vmatpush1.bf16.msra.mxu0 %v256
    %365 = vmatprep.subr.bf16.mxu0 0
    %366 = vmatpush1.bf16.msra.mxu0 %v359
    %367 = vmatprep.subr.bf16.mxu0 0
    %368 = vmatpush1.bf16.msra.mxu0 0
    %369 = vmatprep.subr.bf16.mxu0 0
    %370 = vmatpush1.bf16.msra.mxu0 0
    %371 = vmatprep.subr.bf16.mxu0 0
    %372 = vmatpush1.bf16.msra.mxu0 0
    %373 = vmatprep.subr.bf16.mxu0 0
    %374 = vmatpush1.bf16.msra.mxu0 0
    %375 = vmatprep.subr.bf16.mxu0 0
    %376 = vmatpush1.bf16.msra.mxu0 0
    %377 = vmatprep.subr.bf16.mxu0 0
    %378 = vmatpush1.bf16.msra.mxu0 0
    %379 = vmatprep.subr.bf16.mxu0 0
    %380 = vmatpush1.bf16.msra.mxu0 0
    %381 = vmatprep.subr.bf16.mxu0 0
    %382 = vmatpush1.bf16.msra.mxu0 0
    %383 = vmatprep.subr.bf16.mxu0 0
    %384 = vmatpush1.bf16.msra.mxu0 0
    %385 = vmatprep.subr.bf16.mxu0 0
    %386 = vmatpush1.bf16.msra.mxu0 0
    %387 = vmatprep.subr.bf16.mxu0 0
    %388 = vmatpush1.bf16.msra.mxu0 0
    %389 = vmatprep.subr.bf16.mxu0 0
    %390 = vmatpush1.bf16.msra.mxu0 0
    %391 = vmatprep.subr.bf16.mxu0 0
    %392 = vmatpush1.bf16.msra.mxu0 0
    %393 = vmatprep.mubr.bf16.mxu0 0
    %394 = vmatmul.mubr.bf16.gmra.mrb[0].mxu0 %v262
    %v395 = vpop.f32.mrb[0].mxu0
    %v396 = vadd.f32 0.0, %v395
    %v397 = vpop.f32.mrb[0].mxu0
    %v398 = vpop.f32.mrb[0].mxu0
    %v399 = vadd.f32 0.0, %v398
    %v400 = vpop.f32.mrb[0].mxu0
    %401 = vmatprep.mubr.bf16.mxu0 0
    %402 = vmatmul.mubr.bf16.gmra.mrb[0].mxu0 %v265
    %v403 = vpop.f32.mrb[0].mxu0
    %v404 = vadd.f32 0.0, %v403
    %v405 = vpop.f32.mrb[0].mxu0
    %v406 = vpop.f32.mrb[0].mxu0
    %v407 = vadd.f32 0.0, %v406
    %v408 = vpop.f32.mrb[0].mxu0
    %409 = vmatprep.mubr.bf16.mxu0 0
    %410 = vmatmul.mubr.bf16.gmra.mrb[0].mxu0 %v268
    %v411 = vpop.f32.mrb[0].mxu0
    %v412 = vadd.f32 0.0, %v411
    %v413 = vpop.f32.mrb[0].mxu0
    %v414 = vpop.f32.mrb[0].mxu0
    %v415 = vadd.f32 0.0, %v414
    %v416 = vpop.f32.mrb[0].mxu0
    %417 = vmatprep.mubr.bf16.mxu0 0
    %418 = vmatmul.mubr.bf16.gmra.mrb[0].mxu0 %v271
    %v419 = vpop.f32.mrb[0].mxu0
    %v420 = vadd.f32 0.0, %v419
    %v421 = vpop.f32.mrb[0].mxu0
    %v422 = vpop.f32.mrb[0].mxu0
    %v423 = vadd.f32 0.0, %v422
    %v424 = vpop.f32.mrb[0].mxu0
    %425 = vmatprep.mubr.bf16.mxu0 0
    %426 = vmatmul.mubr.bf16.gmra.mrb[0].mxu0 %v274
    %v427 = vpop.f32.mrb[0].mxu0
    %v428 = vadd.f32 0.0, %v427
    %v429 = vpop.f32.mrb[0].mxu0
    %v430 = vpop.f32.mrb[0].mxu0
    %v431 = vadd.f32 0.0, %v430
    %v432 = vpop.f32.mrb[0].mxu0
    %433 = vmatprep.mubr.bf16.mxu0 0
    %434 = vmatmul.mubr.bf16.gmra.mrb[0].mxu0 %v277
    %v435 = vpop.f32.mrb[0].mxu0
    %v436 = vadd.f32 0.0, %v435
    %v437 = vpop.f32.mrb[0].mxu0
    %v438 = vpop.f32.mrb[0].mxu0
    %v439 = vadd.f32 0.0, %v438
    %v440 = vpop.f32.mrb[0].mxu0
    %441 = vmatprep.mubr.bf16.mxu0 0
    %442 = vmatmul.mubr.bf16.gmra.mrb[0].mxu0 %v280
    %v443 = vpop.f32.mrb[0].mxu0
    %v444 = vadd.f32 0.0, %v443
    %v445 = vpop.f32.mrb[0].mxu0
    %v446 = vpop.f32.mrb[0].mxu0
    %v447 = vadd.f32 0.0, %v446
    %v448 = vpop.f32.mrb[0].mxu0
    %449 = vmatprep.mubr.bf16.mxu0 0
    %450 = vmatmul.mubr.bf16.gmra.mrb[0].mxu0 %v283
    %v451 = vpop.f32.mrb[0].mxu0
    %v452 = vadd.f32 0.0, %v451
    %v453 = vpop.f32.mrb[0].mxu0
    %v454 = vpop.f32.mrb[0].mxu0
    %v455 = vadd.f32 0.0, %v454
    %v456 = vpop.f32.mrb[0].mxu0
    %457 = vmatprep.mubr.bf16.mxu0 0
    %458 = vmatmul.mubr.bf16.gmra.mrb[0].mxu0 %v286
    %v459 = vpop.f32.mrb[0].mxu0
    %v460 = vadd.f32 0.0, %v459
    %v461 = vpop.f32.mrb[0].mxu0
    %v462 = vpop.f32.mrb[0].mxu0
    %v463 = vadd.f32 0.0, %v462
    %v464 = vpop.f32.mrb[0].mxu0
    %465 = vmatprep.mubr.bf16.mxu0 0
    %466 = vmatmul.mubr.bf16.gmra.mrb[0].mxu0 %v289
    %v467 = vpop.f32.mrb[0].mxu0
    %v468 = vadd.f32 0.0, %v467
    %v469 = vpop.f32.mrb[0].mxu0
    %v470 = vpop.f32.mrb[0].mxu0
    %v471 = vadd.f32 0.0, %v470
    %v472 = vpop.f32.mrb[0].mxu0
    %473 = vmatprep.mubr.bf16.mxu0 0
    %474 = vmatmul.mubr.bf16.gmra.mrb[0].mxu0 %v292
    %v475 = vpop.f32.mrb[0].mxu0
    %v476 = vadd.f32 0.0, %v475
    %v477 = vpop.f32.mrb[0].mxu0
    %v478 = vpop.f32.mrb[0].mxu0
    %v479 = vadd.f32 0.0, %v478
    %v480 = vpop.f32.mrb[0].mxu0
    %481 = vmatprep.mubr.bf16.mxu0 0
    %482 = vmatmul.mubr.bf16.gmra.mrb[0].mxu0 %v295
    %v483 = vpop.f32.mrb[0].mxu0
    %v484 = vadd.f32 0.0, %v483
    %v485 = vpop.f32.mrb[0].mxu0
    %v486 = vpop.f32.mrb[0].mxu0
    %v487 = vadd.f32 0.0, %v486
    %v488 = vpop.f32.mrb[0].mxu0
    %489 = vmatprep.mubr.bf16.mxu0 0
    %490 = vmatmul.mubr.bf16.gmra.mrb[0].mxu0 %v298
    %v491 = vpop.f32.mrb[0].mxu0
    %v492 = vadd.f32 0.0, %v491
    %v493 = vpop.f32.mrb[0].mxu0
    %v494 = vpop.f32.mrb[0].mxu0
    %v495 = vadd.f32 0.0, %v494
    %v496 = vpop.f32.mrb[0].mxu0
    %497 = vmatprep.mubr.bf16.mxu0 0
    %498 = vmatmul.mubr.bf16.gmra.mrb[0].mxu0 %v301
    %v499 = vpop.f32.mrb[0].mxu0
    %v500 = vadd.f32 0.0, %v499
    %v501 = vpop.f32.mrb[0].mxu0
    %v502 = vpop.f32.mrb[0].mxu0
    %v503 = vadd.f32 0.0, %v502
    %v504 = vpop.f32.mrb[0].mxu0
    %505 = vmatprep.mubr.bf16.mxu0 0
    %506 = vmatmul.mubr.bf16.gmra.mrb[0].mxu0 %v304
    %v507 = vpop.f32.mrb[0].mxu0
    %v508 = vadd.f32 0.0, %v507
    %v509 = vpop.f32.mrb[0].mxu0
    %v510 = vpop.f32.mrb[0].mxu0
    %v511 = vadd.f32 0.0, %v510
    %v512 = vpop.f32.mrb[0].mxu0
    %513 = vmatprep.mubr.bf16.mxu0 0
    %514 = vmatmul.mubr.bf16.gmra.mrb[0].mxu0 %v307
    %v515 = vpop.f32.mrb[0].mxu0
    %v516 = vadd.f32 0.0, %v515
    %v517 = vpop.f32.mrb[0].mxu0
    %v518 = vpop.f32.mrb[0].mxu0
    %v519 = vadd.f32 0.0, %v518
    %v520 = vpop.f32.mrb[0].mxu0
    %521 = vmatprep.mubr.bf16.mxu0 0
    %522 = vmatmul.mubr.bf16.gmra.mrb[0].mxu0 %v310
    %v523 = vpop.f32.mrb[0].mxu0
    %v524 = vadd.f32 0.0, %v523
    %v525 = vpop.f32.mrb[0].mxu0
    %v526 = vpop.f32.mrb[0].mxu0
    %v527 = vadd.f32 0.0, %v526
    %v528 = vpop.f32.mrb[0].mxu0
    %529 = vmatprep.mubr.bf16.mxu0 0
    %530 = vmatmul.mubr.bf16.gmra.mrb[0].mxu0 %v313
    %v531 = vpop.f32.mrb[0].mxu0
    %v532 = vadd.f32 0.0, %v531
    %v533 = vpop.f32.mrb[0].mxu0
    %v534 = vpop.f32.mrb[0].mxu0
    %v535 = vadd.f32 0.0, %v534
    %v536 = vpop.f32.mrb[0].mxu0
    %537 = vmatprep.mubr.bf16.mxu0 0
    %538 = vmatmul.mubr.bf16.gmra.mrb[0].mxu0 %v316
    %v539 = vpop.f32.mrb[0].mxu0
    %v540 = vadd.f32 0.0, %v539
    %v541 = vpop.f32.mrb[0].mxu0
    %v542 = vpop.f32.mrb[0].mxu0
    %v543 = vadd.f32 0.0, %v542
    %v544 = vpop.f32.mrb[0].mxu0
    %545 = vmatprep.mubr.bf16.mxu0 0
    %546 = vmatmul.mubr.bf16.gmra.mrb[0].mxu0 %v319
    %v547 = vpop.f32.mrb[0].mxu0
    %v548 = vadd.f32 0.0, %v547
    %v549 = vpop.f32.mrb[0].mxu0
    %v550 = vpop.f32.mrb[0].mxu0
    %v551 = vadd.f32 0.0, %v550
    %v552 = vpop.f32.mrb[0].mxu0
    %553 = vmatprep.mubr.bf16.mxu0 0
    %554 = vmatmul.mubr.bf16.gmra.mrb[0].mxu0 %v322
    %v555 = vpop.f32.mrb[0].mxu0
    %v556 = vadd.f32 0.0, %v555
    %v557 = vpop.f32.mrb[0].mxu0
    %v558 = vpop.f32.mrb[0].mxu0
    %v559 = vadd.f32 0.0, %v558
    %v560 = vpop.f32.mrb[0].mxu0
    %561 = vmatprep.mubr.bf16.mxu0 0
    %562 = vmatmul.mubr.bf16.gmra.mrb[0].mxu0 %v325
    %v563 = vpop.f32.mrb[0].mxu0
    %v564 = vadd.f32 0.0, %v563
    %v565 = vpop.f32.mrb[0].mxu0
    %v566 = vpop.f32.mrb[0].mxu0
    %v567 = vadd.f32 0.0, %v566
    %v568 = vpop.f32.mrb[0].mxu0
    %569 = vmatprep.mubr.bf16.mxu0 0
    %570 = vmatmul.mubr.bf16.gmra.mrb[0].mxu0 %v328
    %v571 = vpop.f32.mrb[0].mxu0
    %v572 = vadd.f32 0.0, %v571
    %v573 = vpop.f32.mrb[0].mxu0
    %v574 = vpop.f32.mrb[0].mxu0
    %v575 = vadd.f32 0.0, %v574
    %v576 = vpop.f32.mrb[0].mxu0
    %577 = vmatprep.mubr.bf16.mxu0 0
    %578 = vmatmul.mubr.bf16.gmra.mrb[0].mxu0 %v331
    %v579 = vpop.f32.mrb[0].mxu0
    %v580 = vadd.f32 0.0, %v579
    %v581 = vpop.f32.mrb[0].mxu0
    %v582 = vpop.f32.mrb[0].mxu0
    %v583 = vadd.f32 0.0, %v582
    %v584 = vpop.f32.mrb[0].mxu0
    %585 = vmatprep.mubr.bf16.mxu0 0
    %586 = vmatmul.mubr.bf16.gmra.mrb[0].mxu0 %v334
    %v587 = vpop.f32.mrb[0].mxu0
    %v588 = vadd.f32 0.0, %v587
    %v589 = vpop.f32.mrb[0].mxu0
    %v590 = vpop.f32.mrb[0].mxu0
    %v591 = vadd.f32 0.0, %v590
    %v592 = vpop.f32.mrb[0].mxu0
    %593 = vmatprep.mubr.bf16.mxu0 0
    %594 = vmatmul.mubr.bf16.gmra.mrb[0].mxu0 %v337
    %v595 = vpop.f32.mrb[0].mxu0
    %v596 = vadd.f32 0.0, %v595
    %v597 = vpop.f32.mrb[0].mxu0
    %v598 = vpop.f32.mrb[0].mxu0
    %v599 = vadd.f32 0.0, %v598
    %v600 = vpop.f32.mrb[0].mxu0
    %601 = vmatprep.mubr.bf16.mxu0 0
    %602 = vmatmul.mubr.bf16.gmra.mrb[0].mxu0 %v340
    %v603 = vpop.f32.mrb[0].mxu0
    %v604 = vadd.f32 0.0, %v603
    %v605 = vpop.f32.mrb[0].mxu0
    %v606 = vpop.f32.mrb[0].mxu0
    %v607 = vadd.f32 0.0, %v606
    %v608 = vpop.f32.mrb[0].mxu0
    %609 = vmatprep.mubr.bf16.mxu0 0
    %610 = vmatmul.mubr.bf16.gmra.mrb[0].mxu0 %v343
    %v611 = vpop.f32.mrb[0].mxu0
    %v612 = vadd.f32 0.0, %v611
    %v613 = vpop.f32.mrb[0].mxu0
    %v614 = vpop.f32.mrb[0].mxu0
    %v615 = vadd.f32 0.0, %v614
    %v616 = vpop.f32.mrb[0].mxu0
    %617 = vmatprep.mubr.bf16.mxu0 0
    %618 = vmatmul.mubr.bf16.gmra.mrb[0].mxu0 %v346
    %v619 = vpop.f32.mrb[0].mxu0
    %v620 = vadd.f32 0.0, %v619
    %v621 = vpop.f32.mrb[0].mxu0
    %v622 = vpop.f32.mrb[0].mxu0
    %v623 = vadd.f32 0.0, %v622
    %v624 = vpop.f32.mrb[0].mxu0
    %625 = vmatprep.mubr.bf16.mxu0 0
    %626 = vmatmul.mubr.bf16.gmra.mrb[0].mxu0 %v349
    %v627 = vpop.f32.mrb[0].mxu0
    %v628 = vadd.f32 0.0, %v627
    %v629 = vpop.f32.mrb[0].mxu0
    %v630 = vpop.f32.mrb[0].mxu0
    %v631 = vadd.f32 0.0, %v630
    %v632 = vpop.f32.mrb[0].mxu0
    %633 = vmatprep.mubr.bf16.mxu0 0
    %634 = vmatmul.mubr.bf16.gmra.mrb[0].mxu0 %v352
    %v635 = vpop.f32.mrb[0].mxu0
    %v636 = vadd.f32 0.0, %v635
    %v637 = vpop.f32.mrb[0].mxu0
    %v638 = vpop.f32.mrb[0].mxu0
    %v639 = vadd.f32 0.0, %v638
    %v640 = vpop.f32.mrb[0].mxu0
    %641 = vmatprep.mubr.bf16.mxu0 0
    %642 = vmatmul.mubr.bf16.gmra.mrb[0].mxu0 %v355
    %v643 = vpop.f32.mrb[0].mxu0
    %v644 = vadd.f32 0.0, %v643
    %v645 = vpop.f32.mrb[0].mxu0
    %v646 = vpop.f32.mrb[0].mxu0
    %v647 = vadd.f32 0.0, %v646
    %v648 = vpop.f32.mrb[0].mxu0
    %649 = vdwg.mxu0
    %650 = vst [vmem:[#allocation2] sm:$0xff] %v396
    %651 = vst [vmem:[#allocation2 + $0x8] sm:$0xff] %v399
    %652 = vst [vmem:[#allocation2 + $0x10] sm:$0xff] %v404
    %653 = vst [vmem:[#allocation2 + $0x18] sm:$0xff] %v407
    %654 = vst [vmem:[#allocation2 + $0x20] sm:$0xff] %v412
    %655 = vst [vmem:[#allocation2 + $0x28] sm:$0xff] %v415
    %656 = vst [vmem:[#allocation2 + $0x30] sm:$0xff] %v420
    %657 = vst [vmem:[#allocation2 + $0x38] sm:$0xff] %v423
    %658 = vst [vmem:[#allocation2 + $0x40] sm:$0xff] %v428
    %659 = vst [vmem:[#allocation2 + $0x48] sm:$0xff] %v431
    %660 = vst [vmem:[#allocation2 + $0x50] sm:$0xff] %v436
    %661 = vst [vmem:[#allocation2 + $0x58] sm:$0xff] %v439
    %662 = vst [vmem:[#allocation2 + $0x60] sm:$0xff] %v444
    %663 = vst [vmem:[#allocation2 + $0x68] sm:$0xff] %v447
    %664 = vst [vmem:[#allocation2 + $0x70] sm:$0xff] %v452
    %665 = vst [vmem:[#allocation2 + $0x78] sm:$0xff] %v455
    %666 = vst [vmem:[#allocation2 + $0x80] sm:$0xff] %v460
    %667 = vst [vmem:[#allocation2 + $0x88] sm:$0xff] %v463
    %668 = vst [vmem:[#allocation2 + $0x90] sm:$0xff] %v468
    %669 = vst [vmem:[#allocation2 + $0x98] sm:$0xff] %v471
    %670 = vst [vmem:[#allocation2 + $0xa0] sm:$0xff] %v476
    %671 = vst [vmem:[#allocation2 + $0xa8] sm:$0xff] %v479
    %672 = vst [vmem:[#allocation2 + $0xb0] sm:$0xff] %v484
    %673 = vst [vmem:[#allocation2 + $0xb8] sm:$0xff] %v487
    %674 = vst [vmem:[#allocation2 + $0xc0] sm:$0xff] %v492
    %675 = vst [vmem:[#allocation2 + $0xc8] sm:$0xff] %v495
    %676 = vst [vmem:[#allocation2 + $0xd0] sm:$0xff] %v500
    %677 = vst [vmem:[#allocation2 + $0xd8] sm:$0xff] %v503
    %678 = vst [vmem:[#allocation2 + $0xe0] sm:$0xff] %v508
    %679 = vst [vmem:[#allocation2 + $0xe8] sm:$0xff] %v511
    %680 = vst [vmem:[#allocation2 + $0xf0] sm:$0xff] %v516
    %681 = vst [vmem:[#allocation2 + $0xf8] sm:$0xff] %v519
    %682 = vst [vmem:[#allocation2 + $0x100] sm:$0xff] %v524
    %683 = vst [vmem:[#allocation2 + $0x108] sm:$0xff] %v527
    %684 = vst [vmem:[#allocation2 + $0x110] sm:$0xff] %v532
    %685 = vst [vmem:[#allocation2 + $0x118] sm:$0xff] %v535
    %686 = vst [vmem:[#allocation2 + $0x120] sm:$0xff] %v540
    %687 = vst [vmem:[#allocation2 + $0x128] sm:$0xff] %v543
    %688 = vst [vmem:[#allocation2 + $0x130] sm:$0xff] %v548
    %689 = vst [vmem:[#allocation2 + $0x138] sm:$0xff] %v551
    %690 = vst [vmem:[#allocation2 + $0x140] sm:$0xff] %v556
    %691 = vst [vmem:[#allocation2 + $0x148] sm:$0xff] %v559
    %692 = vst [vmem:[#allocation2 + $0x150] sm:$0xff] %v564
    %693 = vst [vmem:[#allocation2 + $0x158] sm:$0xff] %v567
    %694 = vst [vmem:[#allocation2 + $0x160] sm:$0xff] %v572
    %695 = vst [vmem:[#allocation2 + $0x168] sm:$0xff] %v575
    %696 = vst [vmem:[#allocation2 + $0x170] sm:$0xff] %v580
    %697 = vst [vmem:[#allocation2 + $0x178] sm:$0xff] %v583
    %698 = vst [vmem:[#allocation2 + $0x180] sm:$0xff] %v588
    %699 = vst [vmem:[#allocation2 + $0x188] sm:$0xff] %v591
    %700 = vst [vmem:[#allocation2 + $0x190] sm:$0xff] %v596
    %701 = vst [vmem:[#allocation2 + $0x198] sm:$0xff] %v599
    %702 = vst [vmem:[#allocation2 + $0x1a0] sm:$0xff] %v604
    %703 = vst [vmem:[#allocation2 + $0x1a8] sm:$0xff] %v607
    %704 = vst [vmem:[#allocation2 + $0x1b0] sm:$0xff] %v612
    %705 = vst [vmem:[#allocation2 + $0x1b8] sm:$0xff] %v615
    %706 = vst [vmem:[#allocation2 + $0x1c0] sm:$0xff] %v620
    %707 = vst [vmem:[#allocation2 + $0x1c8] sm:$0xff] %v623
    %708 = vst [vmem:[#allocation2 + $0x1d0] sm:$0xff] %v628
    %709 = vst [vmem:[#allocation2 + $0x1d8] sm:$0xff] %v631
    %710 = vst [vmem:[#allocation2 + $0x1e0] sm:$0xff] %v636
    %711 = vst [vmem:[#allocation2 + $0x1e8] sm:$0xff] %v639
    %712 = vst [vmem:[#allocation2 + $0x1f0] sm:$0xff] %v644
    %713 = vst [vmem:[#allocation2 + $0x1f8] sm:$0xff] %v647
    %v714 = vadd.f32 %v396, %v399
    %v715 = vadd.f32 %v714, %v404
    %v716 = vadd.f32 %v715, %v407
    %v717 = vadd.f32 %v716, %v412
    %v718 = vadd.f32 %v717, %v415
    %v719 = vadd.f32 %v718, %v420
    %v720 = vadd.f32 %v719, %v423
    %v721 = vadd.f32 %v720, %v428
    %v722 = vadd.f32 %v721, %v431
    %v723 = vadd.f32 %v722, %v436
    %v724 = vadd.f32 %v723, %v439
    %v725 = vadd.f32 %v724, %v444
    %v726 = vadd.f32 %v725, %v447
    %v727 = vadd.f32 %v726, %v452
    %v728 = vadd.f32 %v727, %v455
    %v729 = vadd.f32 %v728, %v460
    %v730 = vadd.f32 %v729, %v463
    %v731 = vadd.f32 %v730, %v468
    %v732 = vadd.f32 %v731, %v471
    %v733 = vadd.f32 %v732, %v476
    %v734 = vadd.f32 %v733, %v479
    %v735 = vadd.f32 %v734, %v484
    %v736 = vadd.f32 %v735, %v487
    %v737 = vadd.f32 %v736, %v492
    %v738 = vadd.f32 %v737, %v495
    %v739 = vadd.f32 %v738, %v500
    %v740 = vadd.f32 %v739, %v503
    %v741 = vadd.f32 %v740, %v508
    %v742 = vadd.f32 %v741, %v511
    %v743 = vadd.f32 %v742, %v516
    %v744 = vadd.f32 %v743, %v519
    %v745 = vadd.f32 %v744, %v524
    %v746 = vadd.f32 %v745, %v527
    %v747 = vadd.f32 %v746, %v532
    %v748 = vadd.f32 %v747, %v535
    %v749 = vadd.f32 %v748, %v540
    %v750 = vadd.f32 %v749, %v543
    %v751 = vadd.f32 %v750, %v548
    %v752 = vadd.f32 %v751, %v551
    %v753 = vadd.f32 %v752, %v556
    %v754 = vadd.f32 %v753, %v559
    %v755 = vadd.f32 %v754, %v564
    %v756 = vadd.f32 %v755, %v567
    %v757 = vadd.f32 %v756, %v572
    %v758 = vadd.f32 %v757, %v575
    %v759 = vadd.f32 %v758, %v580
    %v760 = vadd.f32 %v759, %v583
    %v761 = vadd.f32 %v760, %v588
    %v762 = vadd.f32 %v761, %v591
    %v763 = vadd.f32 %v762, %v596
    %v764 = vadd.f32 %v763, %v599
    %v765 = vadd.f32 %v764, %v604
    %v766 = vadd.f32 %v765, %v607
    %v767 = vadd.f32 %v766, %v612
    %v768 = vadd.f32 %v767, %v615
    %v769 = vadd.f32 %v768, %v620
    %v770 = vadd.f32 %v769, %v623
    %v771 = vadd.f32 %v770, %v628
    %v772 = vadd.f32 %v771, %v631
    %v773 = vadd.f32 %v772, %v636
    %v774 = vadd.f32 %v773, %v639
    %v775 = vadd.f32 %v774, %v644
    %v776 = vadd.f32 %v775, %v647
    %v777 = vrot.slane %v776, 4
    %v778 = vadd.f32 %v776, %v777
    %v779 = vrot.slane %v778, 2
    %v780 = vadd.f32 %v778, %v779
    %v781 = vrot.slane %v780, 1
    %v782 = vadd.f32 %v780, %v781
    %v783 = vmul.f32 %v396, %v396
    %v784 = vmul.f32 %v399, %v399
    %v785 = vmul.f32 %v404, %v404
    %v786 = vmul.f32 %v407, %v407
    %v787 = vmul.f32 %v412, %v412
    %v788 = vmul.f32 %v415, %v415
    %v789 = vmul.f32 %v420, %v420
    %v790 = vmul.f32 %v423, %v423
    %v791 = vmul.f32 %v428, %v428
    %v792 = vmul.f32 %v431, %v431
    %v793 = vmul.f32 %v436, %v436
    %v794 = vmul.f32 %v439, %v439
    %v795 = vmul.f32 %v444, %v444
    %v796 = vmul.f32 %v447, %v447
    %v797 = vmul.f32 %v452, %v452
    %v798 = vmul.f32 %v455, %v455
    %v799 = vmul.f32 %v460, %v460
    %v800 = vmul.f32 %v463, %v463
    %v801 = vmul.f32 %v468, %v468
    %v802 = vmul.f32 %v471, %v471
    %v803 = vmul.f32 %v476, %v476
    %v804 = vmul.f32 %v479, %v479
    %v805 = vmul.f32 %v484, %v484
    %v806 = vmul.f32 %v487, %v487
    %v807 = vmul.f32 %v492, %v492
    %v808 = vmul.f32 %v495, %v495
    %v809 = vmul.f32 %v500, %v500
    %v810 = vmul.f32 %v503, %v503
    %v811 = vmul.f32 %v508, %v508
    %v812 = vmul.f32 %v511, %v511
    %v813 = vmul.f32 %v516, %v516
    %v814 = vmul.f32 %v519, %v519
    %v815 = vmul.f32 %v524, %v524
    %v816 = vmul.f32 %v527, %v527
    %v817 = vmul.f32 %v532, %v532
    %v818 = vmul.f32 %v535, %v535
    %v819 = vmul.f32 %v540, %v540
    %v820 = vmul.f32 %v543, %v543
    %v821 = vmul.f32 %v548, %v548
    %v822 = vmul.f32 %v551, %v551
    %v823 = vmul.f32 %v556, %v556
    %v824 = vmul.f32 %v559, %v559
    %v825 = vmul.f32 %v564, %v564
    %v826 = vmul.f32 %v567, %v567
    %v827 = vmul.f32 %v572, %v572
    %v828 = vmul.f32 %v575, %v575
    %v829 = vmul.f32 %v580, %v580
    %v830 = vmul.f32 %v583, %v583
    %v831 = vmul.f32 %v588, %v588
    %v832 = vmul.f32 %v591, %v591
    %v833 = vmul.f32 %v596, %v596
    %v834 = vmul.f32 %v599, %v599
    %v835 = vmul.f32 %v604, %v604
    %v836 = vmul.f32 %v607, %v607
    %v837 = vmul.f32 %v612, %v612
    %v838 = vmul.f32 %v615, %v615
    %v839 = vmul.f32 %v620, %v620
    %v840 = vmul.f32 %v623, %v623
    %v841 = vmul.f32 %v628, %v628
    %v842 = vmul.f32 %v631, %v631
    %v843 = vmul.f32 %v636, %v636
    %v844 = vmul.f32 %v639, %v639
    %v845 = vmul.f32 %v644, %v644
    %v846 = vmul.f32 %v647, %v647
    %v847 = vadd.f32 %v783, %v784
    %v848 = vadd.f32 %v847, %v785
    %v849 = vadd.f32 %v848, %v786
    %v850 = vadd.f32 %v849, %v787
    %v851 = vadd.f32 %v850, %v788
    %v852 = vadd.f32 %v851, %v789
    %v853 = vadd.f32 %v852, %v790
    %v854 = vadd.f32 %v853, %v791
    %v855 = vadd.f32 %v854, %v792
    %v856 = vadd.f32 %v855, %v793
    %v857 = vadd.f32 %v856, %v794
    %v858 = vadd.f32 %v857, %v795
    %v859 = vadd.f32 %v858, %v796
    %v860 = vadd.f32 %v859, %v797
    %v861 = vadd.f32 %v860, %v798
    %v862 = vadd.f32 %v861, %v799
    %v863 = vadd.f32 %v862, %v800
    %v864 = vadd.f32 %v863, %v801
    %v865 = vadd.f32 %v864, %v802
    %v866 = vadd.f32 %v865, %v803
    %v867 = vadd.f32 %v866, %v804
    %v868 = vadd.f32 %v867, %v805
    %v869 = vadd.f32 %v868, %v806
    %v870 = vadd.f32 %v869, %v807
    %v871 = vadd.f32 %v870, %v808
    %v872 = vadd.f32 %v871, %v809
    %v873 = vadd.f32 %v872, %v810
    %v874 = vadd.f32 %v873, %v811
    %v875 = vadd.f32 %v874, %v812
    %v876 = vadd.f32 %v875, %v813
    %v877 = vadd.f32 %v876, %v814
    %v878 = vadd.f32 %v877, %v815
    %v879 = vadd.f32 %v878, %v816
    %v880 = vadd.f32 %v879, %v817
    %v881 = vadd.f32 %v880, %v818
    %v882 = vadd.f32 %v881, %v819
    %v883 = vadd.f32 %v882, %v820
    %v884 = vadd.f32 %v883, %v821
    %v885 = vadd.f32 %v884, %v822
    %v886 = vadd.f32 %v885, %v823
    %v887 = vadd.f32 %v886, %v824
    %v888 = vadd.f32 %v887, %v825
    %v889 = vadd.f32 %v888, %v826
    %v890 = vadd.f32 %v889, %v827
    %v891 = vadd.f32 %v890, %v828
    %v892 = vadd.f32 %v891, %v829
    %v893 = vadd.f32 %v892, %v830
    %v894 = vadd.f32 %v893, %v831
    %v895 = vadd.f32 %v894, %v832
    %v896 = vadd.f32 %v895, %v833
    %v897 = vadd.f32 %v896, %v834
    %v898 = vadd.f32 %v897, %v835
    %v899 = vadd.f32 %v898, %v836
    %v900 = vadd.f32 %v899, %v837
    %v901 = vadd.f32 %v900, %v838
    %v902 = vadd.f32 %v901, %v839
    %v903 = vadd.f32 %v902, %v840
    %v904 = vadd.f32 %v903, %v841
    %v905 = vadd.f32 %v904, %v842
    %v906 = vadd.f32 %v905, %v843
    %v907 = vadd.f32 %v906, %v844
    %v908 = vadd.f32 %v907, %v845
    %v909 = vadd.f32 %v908, %v846
    %v910 = vrot.slane %v909, 4
    %v911 = vadd.f32 %v909, %v910
    %v912 = vrot.slane %v911, 2
    %v913 = vadd.f32 %v911, %v912
    %v914 = vrot.slane %v913, 1
    %v915 = vadd.f32 %v913, %v914
    %v916 = vlaneseq
    %v917 = vshrl.u32 %v916, 7
    %vm918 = vcmp.eq.s32.totalorder %v917, 0
    %vm919 = vcmp.eq.s32.totalorder %v917, 1
    %v920 = vsel %vm919, %v915, 0.0
    %v921 = vsel %vm918, %v782, %v920
    %922 = vst [vmem:[#allocation4] sm:$0xff] %v921
    // Predicated region
    $region10: #{tpu_custom_call.1} parent=1 // pred_check
      _
    $region11: #{tpu_custom_call.1} parent=1 // pred_check_branch
      %924 = sbr.rel (0) target = $region13
    $region12: #{tpu_custom_call.1} parent=1 // pred_region
      %s926 = ssub.s32 8192, 8192
      %927 = vsyncadd [#allocation3], %s926
      %s928 = sshll.u32 [#allocation2], 4
      %s929 = int_to_ptr.vmem [resolvable:$true] %s928
      %934 = dma.vmem_to_hbm [thread:$0]  %s929, 8192, %s2, [#allocation3], 128, 128, 8
    $region13: #{tpu_custom_call.1} parent=1 // pred_fallthru
      _
    // Predicated region
    $region14: #{tpu_custom_call.1} parent=1 // pred_check
      _
    $region15: #{tpu_custom_call.1} parent=1 // pred_check_branch
      %936 = sbr.rel (0) target = $region17
    $region16: #{tpu_custom_call.1} parent=1 // pred_region
      %s938 = ssub.s32 128, 128
      %939 = vsyncadd [#allocation5], %s938
      %s941 = sshll.u32 [#allocation4], 4
      %s942 = int_to_ptr.vmem [resolvable:$true] %s941
      %944 = dma.vmem_to_hbm [thread:$0]  %s942, 128, %s3, [#allocation5]
    $region17: #{tpu_custom_call.1} parent=1 // pred_fallthru
      _
    // Predicated region
    $region18: #{tpu_custom_call.1} parent=1 // pred_check
      _
    $region19: #{tpu_custom_call.1} parent=1 // pred_check_branch
      %946 = sbr.rel (0) target = $region21
    $region20: #{tpu_custom_call.1} parent=1 // pred_region
      %947 = dma.done [#allocation3], 8192
    $region21: #{tpu_custom_call.1} parent=1 // pred_fallthru
      _
    // Predicated region
    $region22: #{tpu_custom_call.1} parent=1 // pred_check
      _
    $region23: #{tpu_custom_call.1} parent=1 // pred_check_branch
      %949 = sbr.rel (0) target = $region25
    $region24: #{tpu_custom_call.1} parent=1 // pred_region
      %950 = dma.done [#allocation5], 128
    $region25: #{tpu_custom_call.1} parent=1 // pred_fallthru
      _
    %951 = vsyncpa [#allocation3], 1
    %952 = vsyncpa [#allocation5], 1

</llo_original>
